<compile_context>
chip_gen: v7x
topology: tpu7x:2x2x1
jax: 0.10.0
libtpu: 0.0.40
codegen_flags: <defaults>
</compile_context>

<pallas_src>
import jax
import jax.numpy as jnp
from jax import lax
from jax.experimental import pallas as pl
from jax.experimental.pallas import tpu as pltpu

_LANES = 128
_SUBLANES = 8
_MAX_TR = 64                             # max rows per block
_MAX_UNROLL = 2048                       # tr * nslab budget for the unrolled slab loop
_TARGET_BLOCK_BYTES = 2 * 1024 * 1024    # per-input, per-buffer block budget (f32)


def _round_up(x, m):
    return -(-x // m) * m


def _cdiv(a, b):
    return -(-a // b)


# --------------------------------------------------------------------------- #
# Kernel
# --------------------------------------------------------------------------- #
def _make_dice_sums_kernel(*, ts, ncb, total_cols, need_mask):
    """Build the reduction kernel for one static tiling configuration.

    Grid = (row_blocks, halves, col_blocks); the last axis is the reduction.
    Accumulates sum(p*g) and sum((p+g)^2) lane-wise into resident (tr, 128)
    output blocks; the final cross-lane reduce happens in the JAX epilogue.
    """
    nslab = ts // _LANES

    def kernel(p_ref, g_ref, inter_ref, sumsq_ref):
        j = pl.program_id(2)

        @pl.when(j == 0)
        def _():
            inter_ref[...] = jnp.zeros_like(inter_ref)
            sumsq_ref[...] = jnp.zeros_like(sumsq_ref)

        tr = inter_ref.shape[0]

        if need_mask:
            h = pl.program_id(1)
            col0 = (h * ncb + j) * ts           # nominal global start column
            rem = total_cols - col0             # valid columns left (may be <= 0)
            lane = lax.broadcasted_iota(jnp.int32, (tr, _LANES), 1)

        ia = inter_ref[...]
        sa = sumsq_ref[...]
        # Lane-aligned, statically unrolled slab loop: all adds stay on the
        # VPU, all VMEM accesses are 128-lane dense, no cross-lane work.
        for k in range(nslab):
            sl = slice(k * _LANES, (k + 1) * _LANES)
            p = p_ref[:, sl].astype(jnp.float32)
            g = g_ref[:, sl].astype(jnp.float32)
            if need_mask:
                valid = lane < (rem - k * _LANES)
                p = jnp.where(valid, p, 0.0)    # zero out-of-bounds columns
                g = jnp.where(valid, g, 0.0)
            s = p + g
            ia = ia + p * g
            sa = sa + s * s
        inter_ref[...] = ia
        sumsq_ref[...] = sa

    return kernel


# --------------------------------------------------------------------------- #
# Tiling configuration (all static Python)
# --------------------------------------------------------------------------- #
def _choose_config(NC, S):
    # Rows: blocks of <= 64 rows, multiple of 8.  Boundary rows beyond NC are
    # never fetched from HBM and their accumulator rows are discarded later.
    nc8 = _round_up(NC, _SUBLANES)
    nrb = _cdiv(nc8, _MAX_TR)
    tr = _round_up(_cdiv(nc8, nrb), _SUBLANES)

    # Columns: lane-multiple tile sized to the VMEM / unroll budget.
    nslab_max = max(32, _MAX_UNROLL // tr)
    ts_cap = min(nslab_max * _LANES,
                 max(_LANES, (_TARGET_BLOCK_BYTES // (tr * 4) // _LANES) * _LANES))

    ts = min(ts_cap, _round_up(S, _LANES))
    if nrb == 1 and S > _LANES:
        # Keep at least two column blocks so the reduction can be split into
        # two "parallel" halves (both v7x TensorCores get work).
        ts = min(ts, _round_up(_cdiv(S, 2), _LANES))
    ts = max(_LANES, ts)

    CB = _cdiv(S, ts)                     # total column blocks needed
    nh = 2 if (nrb == 1 and CB >= 2) else 1
    ncb = _cdiv(CB, nh)                   # column blocks per half
    need_mask = (nh * ncb * ts) != S      # any out-of-bounds columns at all?
    return dict(tr=tr, ts=ts, nrb=nrb, nh=nh, ncb=ncb, need_mask=need_mask)


# --------------------------------------------------------------------------- #
# pallas_call wrapper
# --------------------------------------------------------------------------- #
def _dice_partial_sums(p2d, g2d, cfg):
    NC, S = p2d.shape
    tr, ts = cfg["tr"], cfg["ts"]
    nrb, nh, ncb = cfg["nrb"], cfg["nh"], cfg["ncb"]
    CB = _cdiv(S, ts)
    last_block = CB - 1

    def in_index(i, h, j):
        # Clamp so a (possibly duplicate) trailing block of the second half
        # never starts past the array; its contribution is masked to zero.
        return (i, jnp.minimum(h * ncb + j, last_block))

    in_spec = pl.BlockSpec((tr, ts), in_index)
    out_spec = pl.BlockSpec((tr, _LANES), lambda i, h, j: (i, h))

    kernel = _make_dice_sums_kernel(ts=ts, ncb=ncb, total_cols=S,
                                    need_mask=cfg["need_mask"])

    out_shape = [jax.ShapeDtypeStruct((nrb * tr, nh * _LANES), jnp.float32)
                 for _ in range(2)]

    # Double-buffered input blocks + small resident lane-wide outputs + margin.
    in_bytes = 2 * tr * ts * (p2d.dtype.itemsize + g2d.dtype.itemsize)
    out_bytes = 2 * 2 * tr * _LANES * 4
    vmem_limit = int(max(16 << 20, min(32 << 20, in_bytes + out_bytes + (8 << 20))))

    return pl.pallas_call(
        kernel,
        out_shape=out_shape,
        grid_spec=pltpu.PrefetchScalarGridSpec(
            num_scalar_prefetch=0,
            grid=(nrb, nh, ncb),
            in_specs=[in_spec, in_spec],
            out_specs=[out_spec, out_spec],
        ),
        compiler_params=pltpu.CompilerParams(
            dimension_semantics=("parallel", "parallel", "arbitrary"),
            vmem_limit_bytes=vmem_limit,
        ),
    )(p2d, g2d)


# --------------------------------------------------------------------------- #
# Public forward pass (matches DiceLoss.forward)
# --------------------------------------------------------------------------- #
def dice_loss(predict, gt, is_average=True, dims=(2, 3, 4)):
    """Matches DiceLoss.forward; `dims` must be the trailing spatial dims."""
    assert tuple(dims) == tuple(range(2, predict.ndim)), (
        "kernel implemented for reductions over the trailing spatial dims")
    N, C = int(predict.shape[0]), int(predict.shape[1])
    S = 1
    for d in dims:
        S *= int(predict.shape[d])
    NC = N * C

    if not jnp.issubdtype(gt.dtype, jnp.floating):
        gt = gt.astype(predict.dtype)

    # Zero-copy views; no host-side padding of the big arrays.
    p2d = predict.reshape(NC, S)
    g2d = gt.reshape(NC, S)

    cfg = _choose_config(NC, S)
    inter_w, sumsq_w = _dice_partial_sums(p2d, g2d, cfg)

    # Tiny epilogue in plain JAX (final cross-lane/halves reduce + dice math).
    intersection = jnp.sum(inter_w[:NC], axis=-1).reshape(N, C)
    sumsq = jnp.sum(sumsq_w[:NC], axis=-1).reshape(N, C)
    union = sumsq - 2.0 * intersection          # = sum(p^2) + sum(g^2)

    dice = (2.0 * intersection + 1e-08) / (union + 1e-08)
    per_sample = 1.0 - jnp.mean(dice, axis=1)
    return jnp.mean(per_sample) if is_average else jnp.sum(per_sample)


# --------------------------------------------------------------------------- #
# Pure-JAX reference (mirrors the PyTorch module)
# --------------------------------------------------------------------------- #
def _reference(predict, gt, is_average=True, dims=(2, 3, 4)):
    predict = predict.astype(jnp.float32)
    gt = gt.astype(jnp.float32)
    intersection = jnp.sum(predict * gt, axis=dims)
    union = jnp.sum(predict * predict, axis=dims) + jnp.sum(gt * gt, axis=dims)
    dice = (2.0 * intersection + 1e-08) / (union + 1e-08)
    dl = 1.0 - jnp.mean(dice, axis=1)
    return jnp.mean(dl) if is_average else jnp.sum(dl)


if __name__ == "__main__":
    key = jax.random.PRNGKey(0)
    k1, k2 = jax.random.split(key)

    # (N, C, D, H, W) = (2, 4, 8, 16, 16) -> NC = 8, S = 2048 (tile aligned).
    shape = (2, 4, 8, 16, 16)
    predict = jax.nn.sigmoid(jax.random.normal(k1, shape, dtype=jnp.float32))
    gt = (jax.random.uniform(k2, shape) > 0.5).astype(jnp.float32)

    loss = jax.block_until_ready(jax.jit(dice_loss)(predict, gt))
    ref = _reference(predict, gt, is_average=True)
    # Tolerances allow for different (blocked) f32 summation order.
    assert jnp.allclose(loss, ref, rtol=1e-4, atol=1e-5), (loss, ref)

    # Ragged shape (rows and columns not tile aligned -> boundary blocks and
    # in-kernel masking, no host-side padding) and the is_average=False path.
    shape2 = (2, 3, 5, 12, 20)                 # NC = 6, S = 1200
    p2 = jax.nn.sigmoid(jax.random.normal(k1, shape2, dtype=jnp.float32))
    g2 = (jax.random.uniform(k2, shape2) > 0.5).astype(jnp.float32)
    loss2 = jax.block_until_ready(
        jax.jit(lambda a, b: dice_loss(a, b, is_average=False))(p2, g2))
    ref2 = _reference(p2, g2, is_average=False)
    assert jnp.allclose(loss2, ref2, rtol=1e-4, atol=1e-5), (loss2, ref2)

    # bf16 inputs: kernel casts to f32 on-chip (halves HBM traffic).
    p3 = predict.astype(jnp.bfloat16)
    g3 = gt.astype(jnp.bfloat16)
    loss3 = jax.block_until_ready(jax.jit(dice_loss)(p3, g3))
    ref3 = _reference(p3, g3, is_average=True)
    assert jnp.allclose(loss3, ref3, rtol=1e-3, atol=1e-4), (loss3, ref3)

    print("KERNEL_OK")
</pallas_src>

<mosaic_0001>
module attributes {stable_mosaic.version = 11 : i64} {
  func.func @kernel(%arg0: i32, %arg1: i32, %arg2: i32, %arg3: memref<8x1024xf32, #tpu.memory_space<vmem>>, %arg4: memref<8x1024xf32, #tpu.memory_space<vmem>>, %arg5: memref<8x128xf32, #tpu.memory_space<vmem>>, %arg6: memref<8x128xf32, #tpu.memory_space<vmem>>) attributes {dimension_semantics = [#tpu.dimension_semantics<parallel>, #tpu.dimension_semantics<parallel>, #tpu.dimension_semantics<arbitrary>], iteration_bounds = array<i64: 1, 2, 1>, scalar_prefetch = 0 : i64, scratch_operands = 0 : i64, tpu.core_type = #tpu.core_type<tc>, window_params = [{transform_indices = @transform_0, window_bounds = array<i64: 8, 1024>}, {transform_indices = @transform_1, window_bounds = array<i64: 8, 1024>}, {transform_indices = @transform_2, window_bounds = array<i64: 8, 128>}, {transform_indices = @transform_3, window_bounds = array<i64: 8, 128>}]} {
    %c0_i32 = arith.constant 0 : i32
    %0 = arith.cmpi eq, %arg2, %c0_i32 : i32
    %1 = arith.extui %0 : i1 to i32
    %c0_i32_0 = arith.constant 0 : i32
    %2 = arith.cmpi ne, %1, %c0_i32_0 : i32
    scf.if %2 {
      %cst = arith.constant 0.000000e+00 : f32
      %63 = vector.broadcast %cst : f32 to vector<8x128xf32>
      %c0_33 = arith.constant 0 : index
      %c0_34 = arith.constant 0 : index
      %64 = vector.load %arg5[%c0_33, %c0_34] : memref<8x128xf32, #tpu.memory_space<vmem>>, vector<8x128xf32>
      tpu.vector_store %arg5[%c0_33, %c0_34], %63 {strides = array<i32>} : memref<8x128xf32, #tpu.memory_space<vmem>>, vector<8x128xf32>,
      %cst_35 = arith.constant 0.000000e+00 : f32
      %65 = vector.broadcast %cst_35 : f32 to vector<8x128xf32>
      %c0_36 = arith.constant 0 : index
      %c0_37 = arith.constant 0 : index
      %66 = vector.load %arg6[%c0_36, %c0_37] : memref<8x128xf32, #tpu.memory_space<vmem>>, vector<8x128xf32>
      tpu.vector_store %arg6[%c0_36, %c0_37], %65 {strides = array<i32>} : memref<8x128xf32, #tpu.memory_space<vmem>>, vector<8x128xf32>,
    } else {
    }
    %c0 = arith.constant 0 : index
    %c0_1 = arith.constant 0 : index
    %3 = vector.load %arg5[%c0, %c0_1] : memref<8x128xf32, #tpu.memory_space<vmem>>, vector<8x128xf32>
    %c0_2 = arith.constant 0 : index
    %c0_3 = arith.constant 0 : index
    %4 = vector.load %arg6[%c0_2, %c0_3] : memref<8x128xf32, #tpu.memory_space<vmem>>, vector<8x128xf32>
    %c0_4 = arith.constant 0 : index
    %c0_5 = arith.constant 0 : index
    %5 = vector.load %arg3[%c0_4, %c0_5] : memref<8x1024xf32, #tpu.memory_space<vmem>>, vector<8x128xf32>
    %c0_6 = arith.constant 0 : index
    %c0_7 = arith.constant 0 : index
    %6 = vector.load %arg4[%c0_6, %c0_7] : memref<8x1024xf32, #tpu.memory_space<vmem>>, vector<8x128xf32>
    %7 = arith.addf %5, %6 : vector<8x128xf32>
    %8 = arith.mulf %5, %6 : vector<8x128xf32>
    %9 = arith.addf %3, %8 : vector<8x128xf32>
    %10 = arith.mulf %7, %7 : vector<8x128xf32>
    %11 = arith.addf %4, %10 : vector<8x128xf32>
    %c0_8 = arith.constant 0 : index
    %c128 = arith.constant 128 : index
    %12 = vector.load %arg3[%c0_8, %c128] : memref<8x1024xf32, #tpu.memory_space<vmem>>, vector<8x128xf32>
    %c0_9 = arith.constant 0 : index
    %c128_10 = arith.constant 128 : index
    %13 = vector.load %arg4[%c0_9, %c128_10] : memref<8x1024xf32, #tpu.memory_space<vmem>>, vector<8x128xf32>
    %14 = arith.addf %12, %13 : vector<8x128xf32>
    %15 = arith.mulf %12, %13 : vector<8x128xf32>
    %16 = arith.addf %9, %15 : vector<8x128xf32>
    %17 = arith.mulf %14, %14 : vector<8x128xf32>
    %18 = arith.addf %11, %17 : vector<8x128xf32>
    %c0_11 = arith.constant 0 : index
    %c256 = arith.constant 256 : index
    %19 = vector.load %arg3[%c0_11, %c256] : memref<8x1024xf32, #tpu.memory_space<vmem>>, vector<8x128xf32>
    %c0_12 = arith.constant 0 : index
    %c256_13 = arith.constant 256 : index
    %20 = vector.load %arg4[%c0_12, %c256_13] : memref<8x1024xf32, #tpu.memory_space<vmem>>, vector<8x128xf32>
    %21 = arith.addf %19, %20 : vector<8x128xf32>
    %22 = arith.mulf %19, %20 : vector<8x128xf32>
    %23 = arith.addf %16, %22 : vector<8x128xf32>
    %24 = arith.mulf %21, %21 : vector<8x128xf32>
    %25 = arith.addf %18, %24 : vector<8x128xf32>
    %c0_14 = arith.constant 0 : index
    %c384 = arith.constant 384 : index
    %26 = vector.load %arg3[%c0_14, %c384] : memref<8x1024xf32, #tpu.memory_space<vmem>>, vector<8x128xf32>
    %c0_15 = arith.constant 0 : index
    %c384_16 = arith.constant 384 : index
    %27 = vector.load %arg4[%c0_15, %c384_16] : memref<8x1024xf32, #tpu.memory_space<vmem>>, vector<8x128xf32>
    %28 = arith.addf %26, %27 : vector<8x128xf32>
    %29 = arith.mulf %26, %27 : vector<8x128xf32>
    %30 = arith.addf %23, %29 : vector<8x128xf32>
    %31 = arith.mulf %28, %28 : vector<8x128xf32>
    %32 = arith.addf %25, %31 : vector<8x128xf32>
    %c0_17 = arith.constant 0 : index
    %c512 = arith.constant 512 : index
    %33 = vector.load %arg3[%c0_17, %c512] : memref<8x1024xf32, #tpu.memory_space<vmem>>, vector<8x128xf32>
    %c0_18 = arith.constant 0 : index
    %c512_19 = arith.constant 512 : index
    %34 = vector.load %arg4[%c0_18, %c512_19] : memref<8x1024xf32, #tpu.memory_space<vmem>>, vector<8x128xf32>
    %35 = arith.addf %33, %34 : vector<8x128xf32>
    %36 = arith.mulf %33, %34 : vector<8x128xf32>
    %37 = arith.addf %30, %36 : vector<8x128xf32>
    %38 = arith.mulf %35, %35 : vector<8x128xf32>
    %39 = arith.addf %32, %38 : vector<8x128xf32>
    %c0_20 = arith.constant 0 : index
    %c640 = arith.constant 640 : index
    %40 = vector.load %arg3[%c0_20, %c640] : memref<8x1024xf32, #tpu.memory_space<vmem>>, vector<8x128xf32>
    %c0_21 = arith.constant 0 : index
    %c640_22 = arith.constant 640 : index
    %41 = vector.load %arg4[%c0_21, %c640_22] : memref<8x1024xf32, #tpu.memory_space<vmem>>, vector<8x128xf32>
    %42 = arith.addf %40, %41 : vector<8x128xf32>
    %43 = arith.mulf %40, %41 : vector<8x128xf32>
    %44 = arith.addf %37, %43 : vector<8x128xf32>
    %45 = arith.mulf %42, %42 : vector<8x128xf32>
    %46 = arith.addf %39, %45 : vector<8x128xf32>
    %c0_23 = arith.constant 0 : index
    %c768 = arith.constant 768 : index
    %47 = vector.load %arg3[%c0_23, %c768] : memref<8x1024xf32, #tpu.memory_space<vmem>>, vector<8x128xf32>
    %c0_24 = arith.constant 0 : index
    %c768_25 = arith.constant 768 : index
    %48 = vector.load %arg4[%c0_24, %c768_25] : memref<8x1024xf32, #tpu.memory_space<vmem>>, vector<8x128xf32>
    %49 = arith.addf %47, %48 : vector<8x128xf32>
    %50 = arith.mulf %47, %48 : vector<8x128xf32>
    %51 = arith.addf %44, %50 : vector<8x128xf32>
    %52 = arith.mulf %49, %49 : vector<8x128xf32>
    %53 = arith.addf %46, %52 : vector<8x128xf32>
    %c0_26 = arith.constant 0 : index
    %c896 = arith.constant 896 : index
    %54 = vector.load %arg3[%c0_26, %c896] : memref<8x1024xf32, #tpu.memory_space<vmem>>, vector<8x128xf32>
    %c0_27 = arith.constant 0 : index
    %c896_28 = arith.constant 896 : index
    %55 = vector.load %arg4[%c0_27, %c896_28] : memref<8x1024xf32, #tpu.memory_space<vmem>>, vector<8x128xf32>
    %56 = arith.addf %54, %55 : vector<8x128xf32>
    %57 = arith.mulf %54, %55 : vector<8x128xf32>
    %58 = arith.addf %51, %57 : vector<8x128xf32>
    %59 = arith.mulf %56, %56 : vector<8x128xf32>
    %60 = arith.addf %53, %59 : vector<8x128xf32>
    %c0_29 = arith.constant 0 : index
    %c0_30 = arith.constant 0 : index
    %61 = vector.load %arg5[%c0_29, %c0_30] : memref<8x128xf32, #tpu.memory_space<vmem>>, vector<8x128xf32>
    tpu.vector_store %arg5[%c0_29, %c0_30], %58 {strides = array<i32>} : memref<8x128xf32, #tpu.memory_space<vmem>>, vector<8x128xf32>,
    %c0_31 = arith.constant 0 : index
    %c0_32 = arith.constant 0 : index
    %62 = vector.load %arg6[%c0_31, %c0_32] : memref<8x128xf32, #tpu.memory_space<vmem>>, vector<8x128xf32>
    tpu.vector_store %arg6[%c0_31, %c0_32], %60 {strides = array<i32>} : memref<8x128xf32, #tpu.memory_space<vmem>>, vector<8x128xf32>,
    return
  }
  func.func @transform_0(%arg0: i32, %arg1: i32, %arg2: i32) -> (i32, i32) {
    %c1_i32 = arith.constant 1 : i32
    %0 = arith.muli %arg1, %c1_i32 : i32
    %1 = arith.addi %0, %arg2 : i32
    %c1_i32_0 = arith.constant 1 : i32
    %2 = arith.minsi %1, %c1_i32_0 : i32
    %c0_i32 = arith.constant 0 : i32
    return %arg0, %2 : i32, i32
  }
  func.func @transform_1(%arg0: i32, %arg1: i32, %arg2: i32) -> (i32, i32) {
    %c1_i32 = arith.constant 1 : i32
    %0 = arith.muli %arg1, %c1_i32 : i32
    %1 = arith.addi %0, %arg2 : i32
    %c1_i32_0 = arith.constant 1 : i32
    %2 = arith.minsi %1, %c1_i32_0 : i32
    %c0_i32 = arith.constant 0 : i32
    return %arg0, %2 : i32, i32
  }
  func.func @transform_2(%arg0: i32, %arg1: i32, %arg2: i32) -> (i32, i32) {
    %c0_i32 = arith.constant 0 : i32
    return %arg0, %arg1 : i32, i32
  }
  func.func @transform_3(%arg0: i32, %arg1: i32, %arg2: i32) -> (i32, i32) {
    %c0_i32 = arith.constant 0 : i32
    return %arg0, %arg1 : i32, i32
  }
}

</mosaic_0001>

<llo_original>
// kernel: dice_loss.1
$region0: #{dice_loss.1}
  #allocation0 [shape = 'u32[]', space=smem, size = 0x4, offset = 0x4, fixed_abs, tag = 'smem constant byte address 0x4 - core index']
  #allocation1 [shape = 'u32[144,128]{1,0:T(1,128)}', space=vmem, size = 0x12000, scoped, tag = 'internal scratch']
  %s0 = inlined_call_operand.vmem [shape: f32[8,2048], index: 0, kind: input, shape index: {}]
  %s1 = inlined_call_operand.vmem [shape: f32[8,2048], index: 1, kind: input, shape index: {}]
  %s2 = inlined_call_operand.vmem [shape: f32[8,256], index: 2, kind: output, shape index: {0}]
  %s3 = inlined_call_operand.vmem [shape: f32[8,256], index: 3, kind: output, shape index: {1}]
  %4 = xla_tuple %s2, %s3
  %s5 = sld [smem:[#allocation0]]
  $region53: #{dice_loss.1} parent=0
    _
  %s7 = ssub.s32 1, %s5
  %s8 = scalar_select 0, %s7, %s5
  loop: start=0, step=1, limit=4
  $region2: #{dice_loss.1} parent=0 // loop_pre_header
    _
  $region3: #{dice_loss.1} parent=0 // loop_header
    %s10 = sphi 0, %s14
    %p11 = scmp.ge.s32.totalorder %s10, 4
    %s17 = sphi 0, %s36
    %s18 = sphi 0, %s32
    %s19 = sphi 0, %s28
    %s20 = sphi 0, %s17
    %s21 = sphi 0, %s18
    %s22 = sphi 0, %s19
    %s23 = sphi 0, %s20
    %s24 = sphi 0, %s21
    %s25 = sphi 0, %s22
    %s47 = sphi 0, %s49
    %s50 = sphi 0, %s47
    %s51 = sphi 0, %s50
    %s67 = sphi 0, %s51
    %s81 = sphi 0, %s83
    %s84 = sphi 0, %s81
    %s85 = sphi 0, %s84
    %s101 = sphi 0, %s85
    %s109 = sphi 0, %s111
    %s112 = sphi 0, %s109
    %s113 = sphi 0, %s112
    %s129 = sphi 0, %s113
    %s137 = sphi 0, %s139
    %s140 = sphi 0, %s137
    %s141 = sphi 0, %s140
    %s157 = sphi 0, %s141
  $region4: #{dice_loss.1} parent=0 // loop_header_branch
    %13 = sbr.rel (%p11) target = $region8
  $region5: #{dice_loss.1} parent=0 // loop_body
    %s15 = ssub.s32 %s10, 1
    %s16 = ssub.s32 %s10, 2
    %s26 = sadd.s32 1, %s19
    %p27 = scmp.ge.s32.totalorder %s26, 1
    %s28 = scalar_select %p27, 0, %s26
    %s29 = sadd.s32 1, %s18
    %s30 = scalar_select %p27, %s29, %s18
    %p31 = scmp.ge.s32.totalorder %s30, 2
    %s32 = scalar_select %p31, 0, %s30
    %s33 = sadd.s32 1, %s17
    %s34 = scalar_select %p31, %s33, %s17
    %p35 = scmp.ge.s32.totalorder %s34, 1
    %s36 = scalar_select %p35, 0, %s34
    %s37 = sadd.s32 %s18, %s19
    %p38 = scmp.lt.s32.totalorder %s37, 1
    %s39 = scalar_select %p38, %s37, 1
    %s40 = sadd.s32 %s32, %s28
    %p41 = scmp.lt.s32.totalorder %s40, 1
    %s42 = scalar_select %p41, %s40, 1
    %s43 = ssub.s32 %s17, %s36
    %s44 = ssub.s32 %s39, %s42
    %s45 = sor.u32 %s43, %s44
    %p46 = scmp.eq.s32.totalorder %s45, 0
    %s48 = sadd.s32 %s47, 1
    %s49 = scalar_select %p46, %s47, %s48
    %p52 = pneg %p46
    %p53 = scmp.eq.s32.totalorder %s10, 1
    %p54 = por %p52, %p53
    %p55 = scmp.ne.s32.totalorder %s47, %s50
    %p56 = scmp.eq.s32.totalorder %s10, 0
    %p57 = por %p55, %p56
    %p58 = scmp.ne.s32.totalorder %s47, %s50
    %p59 = scmp.eq.s32.totalorder %s15, 1
    %p60 = por %p58, %p59
    %p61 = scmp.ne.s32.totalorder %s50, %s51
    %p62 = scmp.eq.s32.totalorder %s15, 0
    %p63 = por %p61, %p62
    %p64 = scmp.ne.s32.totalorder %s50, %s51
    %p65 = scmp.eq.s32.totalorder %s16, 1
    %p66 = por %p64, %p65
    %p68 = scmp.ne.s32.totalorder %s51, %s67
    %p69 = scmp.eq.s32.totalorder %s16, 0
    %p70 = por %p68, %p69
    %s71 = sadd.s32 %s18, %s19
    %p72 = scmp.lt.s32.totalorder %s71, 1
    %s73 = scalar_select %p72, %s71, 1
    %s74 = sadd.s32 %s32, %s28
    %p75 = scmp.lt.s32.totalorder %s74, 1
    %s76 = scalar_select %p75, %s74, 1
    %s77 = ssub.s32 %s17, %s36
    %s78 = ssub.s32 %s73, %s76
    %s79 = sor.u32 %s77, %s78
    %p80 = scmp.eq.s32.totalorder %s79, 0
    %s82 = sadd.s32 %s81, 1
    %s83 = scalar_select %p80, %s81, %s82
    %p86 = pneg %p80
    %p87 = scmp.eq.s32.totalorder %s10, 1
    %p88 = por %p86, %p87
    %p89 = scmp.ne.s32.totalorder %s81, %s84
    %p90 = scmp.eq.s32.totalorder %s10, 0
    %p91 = por %p89, %p90
    %p92 = scmp.ne.s32.totalorder %s81, %s84
    %p93 = scmp.eq.s32.totalorder %s15, 1
    %p94 = por %p92, %p93
    %p95 = scmp.ne.s32.totalorder %s84, %s85
    %p96 = scmp.eq.s32.totalorder %s15, 0
    %p97 = por %p95, %p96
    %p98 = scmp.ne.s32.totalorder %s84, %s85
    %p99 = scmp.eq.s32.totalorder %s16, 1
    %p100 = por %p98, %p99
    %p102 = scmp.ne.s32.totalorder %s85, %s101
    %p103 = scmp.eq.s32.totalorder %s16, 0
    %p104 = por %p102, %p103
    %s105 = ssub.s32 %s17, %s36
    %s106 = ssub.s32 %s18, %s32
    %s107 = sor.u32 %s105, %s106
    %p108 = scmp.eq.s32.totalorder %s107, 0
    %s110 = sadd.s32 %s109, 1
    %s111 = scalar_select %p108, %s109, %s110
    %p114 = pneg %p108
    %p115 = scmp.eq.s32.totalorder %s10, 1
    %p116 = por %p114, %p115
    %p117 = scmp.ne.s32.totalorder %s109, %s112
    %p118 = scmp.eq.s32.totalorder %s10, 0
    %p119 = por %p117, %p118
    %p120 = scmp.ne.s32.totalorder %s109, %s112
    %p121 = scmp.eq.s32.totalorder %s15, 1
    %p122 = por %p120, %p121
    %p123 = scmp.ne.s32.totalorder %s112, %s113
    %p124 = scmp.eq.s32.totalorder %s15, 0
    %p125 = por %p123, %p124
    %p126 = scmp.ne.s32.totalorder %s112, %s113
    %p127 = scmp.eq.s32.totalorder %s16, 1
    %p128 = por %p126, %p127
    %p130 = scmp.ne.s32.totalorder %s113, %s129
    %p131 = scmp.eq.s32.totalorder %s16, 0
    %p132 = por %p130, %p131
    %s133 = ssub.s32 %s17, %s36
    %s134 = ssub.s32 %s18, %s32
    %s135 = sor.u32 %s133, %s134
    %p136 = scmp.eq.s32.totalorder %s135, 0
    %s138 = sadd.s32 %s137, 1
    %s139 = scalar_select %p136, %s137, %s138
    %p142 = pneg %p136
    %p143 = scmp.eq.s32.totalorder %s10, 1
    %p144 = por %p142, %p143
    %p145 = scmp.ne.s32.totalorder %s137, %s140
    %p146 = scmp.eq.s32.totalorder %s10, 0
    %p147 = por %p145, %p146
    %p148 = scmp.ne.s32.totalorder %s137, %s140
    %p149 = scmp.eq.s32.totalorder %s15, 1
    %p150 = por %p148, %p149
    %p151 = scmp.ne.s32.totalorder %s140, %s141
    %p152 = scmp.eq.s32.totalorder %s15, 0
    %p153 = por %p151, %p152
    %p154 = scmp.ne.s32.totalorder %s140, %s141
    %p155 = scmp.eq.s32.totalorder %s16, 1
    %p156 = por %p154, %p155
    %p158 = scmp.ne.s32.totalorder %s141, %s157
    %p159 = scmp.eq.s32.totalorder %s16, 0
    %p160 = por %p158, %p159
    %p161 = scmp.le.s32.totalorder 1, %s10
    %p162 = scmp.lt.s32.totalorder %s10, 3
    %p163 = pnand %p161, %p162
    %p164 = pneg %p163
    // Predicated region
    $region9: #{dice_loss.1} parent=5 // pred_check
      _
    $region10: #{dice_loss.1} parent=5 // pred_check_branch
      %166 = sbr.rel (%p163) target = $region12
    $region11: #{dice_loss.1} parent=5 // pred_region
      %s167 = ssub.s32 %s10, 1
    $region12: #{dice_loss.1} parent=5 // pred_fallthru
      _
    %p168 = scmp.lt.s32.totalorder %s10, 2
    // Predicated region
    $region13: #{dice_loss.1} parent=5 // pred_check
      %p169 = pneg %p168
    $region14: #{dice_loss.1} parent=5 // pred_check_branch
      %171 = sbr.rel (%p169) target = $region16
    $region15: #{dice_loss.1} parent=5 // pred_region
      // Predicated region
      $region17: #{dice_loss.1} parent=15 // pred_check
        %p172 = pneg %p57
      $region18: #{dice_loss.1} parent=15 // pred_check_branch
        %174 = sbr.rel (%p172) target = $region20
      $region19: #{dice_loss.1} parent=15 // pred_region
        %s175 = sadd.s32 %s18, %s19
        %p176 = scmp.lt.s32.totalorder %s175, 1
        %s177 = scalar_select %p176, %s175, 1
        %s178 = smul.u32 8, %s177
        %p179 = scmp.lt.s32.totalorder %s17, 0
        %s180 = scalar_select %p179, %s17, 0
        %p181 = scmp.lt.s32.totalorder %s178, 15
        %s182 = scalar_select %p181, %s178, 15
        %s183 = smul.addr %s180, 16
        %s184 = sadd.s32 %s182, %s183
        %s185 = smul.addr %s184, 8
        %s186 = scalar_lea.vmem %s0, %s185
        %s187 = sadd.s32 %s18, %s19
        %p188 = scmp.lt.s32.totalorder %s187, 1
        %s189 = scalar_select %p188, %s187, 1
        %s190 = smul.u32 8, %s189
      $region20: #{dice_loss.1} parent=15 // pred_fallthru
        _
      // Predicated region
      $region21: #{dice_loss.1} parent=15 // pred_check
        %p191 = pneg %p91
      $region22: #{dice_loss.1} parent=15 // pred_check_branch
        %193 = sbr.rel (%p191) target = $region24
      $region23: #{dice_loss.1} parent=15 // pred_region
        %s194 = sadd.s32 %s18, %s19
        %p195 = scmp.lt.s32.totalorder %s194, 1
        %s196 = scalar_select %p195, %s194, 1
        %s197 = smul.u32 8, %s196
        %p198 = scmp.lt.s32.totalorder %s17, 0
        %s199 = scalar_select %p198, %s17, 0
        %p200 = scmp.lt.s32.totalorder %s197, 15
        %s201 = scalar_select %p200, %s197, 15
        %s202 = smul.addr %s199, 16
        %s203 = sadd.s32 %s201, %s202
        %s204 = smul.addr %s203, 8
        %s205 = scalar_lea.vmem %s1, %s204
        %s206 = sadd.s32 %s18, %s19
        %p207 = scmp.lt.s32.totalorder %s206, 1
        %s208 = scalar_select %p207, %s206, 1
        %s209 = smul.u32 8, %s208
      $region24: #{dice_loss.1} parent=15 // pred_fallthru
        _
    $region16: #{dice_loss.1} parent=5 // pred_fallthru
      _
    %p210 = scmp.le.s32.totalorder 1, %s10
    %p211 = scmp.lt.s32.totalorder %s10, 3
    %p212 = pnand %p210, %p211
    %p213 = pneg %p212
    // Predicated region
    $region25: #{dice_loss.1} parent=5 // pred_check
      _
    $region26: #{dice_loss.1} parent=5 // pred_check_branch
      %215 = sbr.rel (%p212) target = $region28
    $region27: #{dice_loss.1} parent=5 // pred_region
      %s216 = ssub.s32 %s10, 1
      %s217 = sadd.s32 %s21, %s22
      %p218 = scmp.lt.s32.totalorder %s217, 1
      %s219 = scalar_select %p218, %s217, 1
      %s220 = smul.u32 8, %s219
      %p221 = scmp.lt.s32.totalorder %s20, 0
      %s222 = scalar_select %p221, %s20, 0
      %p223 = scmp.lt.s32.totalorder %s220, 15
      %s224 = scalar_select %p223, %s220, 15
      %s225 = smul.addr %s222, 16
      %s226 = sadd.s32 %s224, %s225
      %s227 = smul.addr %s226, 8
      %s228 = scalar_lea.vmem %s0, %s227
      %p229 = pneg %p63
      %p230 = pneg %p60
      %s231 = sadd.s32 %s21, %s22
      %p232 = scmp.lt.s32.totalorder %s231, 1
      %s233 = scalar_select %p232, %s231, 1
      %s234 = smul.u32 8, %s233
      %p235 = scmp.lt.s32.totalorder %s20, 0
      %s236 = scalar_select %p235, %s20, 0
      %p237 = scmp.lt.s32.totalorder %s234, 15
      %s238 = scalar_select %p237, %s234, 15
      %s239 = smul.addr %s236, 16
      %s240 = sadd.s32 %s238, %s239
      %s241 = smul.addr %s240, 8
      %s242 = scalar_lea.vmem %s1, %s241
      %p243 = pneg %p97
      %p244 = pneg %p94
      %p245 = pneg %p125
      %p246 = pneg %p122
      %p247 = scmp.lt.s32.totalorder %s20, 0
      %s248 = scalar_select %p247, %s20, 0
      %p249 = scmp.lt.s32.totalorder %s21, 1
      %s250 = scalar_select %p249, %s21, 1
      %s251 = smul.addr %s248, 2
      %s252 = sadd.s32 %s250, %s251
      %s253 = smul.addr %s252, 8
      %s254 = scalar_lea.vmem %s2, %s253
      %p255 = pneg %p153
      %p256 = pneg %p150
      %p257 = scmp.lt.s32.totalorder %s20, 0
      %s258 = scalar_select %p257, %s20, 0
      %p259 = scmp.lt.s32.totalorder %s21, 1
      %s260 = scalar_select %p259, %s21, 1
      %s261 = smul.addr %s258, 2
      %s262 = sadd.s32 %s260, %s261
      %s263 = smul.addr %s262, 8
      %s264 = scalar_lea.vmem %s3, %s263
      %s265 = sadd.s32 %s21, %s22
      %p266 = scmp.lt.s32.totalorder %s265, 1
      %s267 = scalar_select %p266, %s265, 1
      %s268 = smul.u32 8, %s267
      %p269 = scmp.lt.s32.totalorder %s20, 0
      %s270 = scalar_select %p269, %s20, 0
      %p271 = scmp.lt.s32.totalorder %s268, 15
      %s272 = scalar_select %p271, %s268, 15
      %s273 = smul.addr %s270, 16
      %s274 = sadd.s32 %s272, %s273
      %s275 = smul.addr %s274, 8
      %s276 = scalar_lea.vmem %s0, %s275
      %s277 = sadd.s32 %s21, %s22
      %p278 = scmp.lt.s32.totalorder %s277, 1
      %s279 = scalar_select %p278, %s277, 1
      %s280 = smul.u32 8, %s279
      %s281 = sadd.s32 %s21, %s22
      %p282 = scmp.lt.s32.totalorder %s281, 1
      %s283 = scalar_select %p282, %s281, 1
      %s284 = smul.u32 8, %s283
      %p285 = scmp.lt.s32.totalorder %s20, 0
      %s286 = scalar_select %p285, %s20, 0
      %p287 = scmp.lt.s32.totalorder %s284, 15
      %s288 = scalar_select %p287, %s284, 15
      %s289 = smul.addr %s286, 16
      %s290 = sadd.s32 %s288, %s289
      %s291 = smul.addr %s290, 8
      %s292 = scalar_lea.vmem %s1, %s291
      %s293 = sadd.s32 %s21, %s22
      %p294 = scmp.lt.s32.totalorder %s293, 1
      %s295 = scalar_select %p294, %s293, 1
      %s296 = smul.u32 8, %s295
      %p297 = scmp.lt.s32.totalorder %s20, 0
      %s298 = scalar_select %p297, %s20, 0
      %p299 = scmp.lt.s32.totalorder %s21, 1
      %s300 = scalar_select %p299, %s21, 1
      %s301 = smul.addr %s298, 2
      %s302 = sadd.s32 %s300, %s301
      %s303 = smul.addr %s302, 8
      %s304 = scalar_lea.vmem %s2, %s303
      %p305 = scmp.lt.s32.totalorder %s20, 0
      %s306 = scalar_select %p305, %s20, 0
      %p307 = scmp.lt.s32.totalorder %s21, 1
      %s308 = scalar_select %p307, %s21, 1
      %s309 = smul.addr %s306, 2
      %s310 = sadd.s32 %s308, %s309
      %s311 = smul.addr %s310, 8
      %s312 = scalar_lea.vmem %s3, %s311
      %p313 = scmp.eq.s32.totalorder %s22, 0
      // Predicated region
      $region29: #{dice_loss.1} parent=27 // pred_check
        %p314 = pneg %p313
      $region30: #{dice_loss.1} parent=27 // pred_check_branch
        %316 = sbr.rel (%p314) target = $region32
      $region31: #{dice_loss.1} parent=27 // pred_region
        %317 = vst [vmem:[%s304] sm:$0xff] 0.0
        %318 = vst [vmem:[%s312] sm:$0xff] 0.0
      $region32: #{dice_loss.1} parent=27 // pred_fallthru
        _
      %v319 = vld [vmem:[%s304] sm:$0xff]
      %v320 = vld [vmem:[%s312] sm:$0xff]
      %v321 = vld [vmem:[%s276] sm:$0xff]
      %v322 = vld [vmem:[%s292] sm:$0xff]
      %v323 = vadd.f32 %v321, %v322
      %v324 = vmul.f32 %v321, %v322
      %v325 = vadd.f32 %v319, %v324
      %v326 = vmul.f32 %v323, %v323
      %v327 = vadd.f32 %v320, %v326
      %v328 = vld [vmem:[%s276 + $0x8] sm:$0xff]
      %v329 = vld [vmem:[%s292 + $0x8] sm:$0xff]
      %v330 = vadd.f32 %v328, %v329
      %v331 = vmul.f32 %v328, %v329
      %v332 = vadd.f32 %v325, %v331
      %v333 = vmul.f32 %v330, %v330
      %v334 = vadd.f32 %v327, %v333
      %v335 = vld [vmem:[%s276 + $0x10] sm:$0xff]
      %v336 = vld [vmem:[%s292 + $0x10] sm:$0xff]
      %v337 = vadd.f32 %v335, %v336
      %v338 = vmul.f32 %v335, %v336
      %v339 = vadd.f32 %v332, %v338
      %v340 = vmul.f32 %v337, %v337
      %v341 = vadd.f32 %v334, %v340
      %v342 = vld [vmem:[%s276 + $0x18] sm:$0xff]
      %v343 = vld [vmem:[%s292 + $0x18] sm:$0xff]
      %v344 = vadd.f32 %v342, %v343
      %v345 = vmul.f32 %v342, %v343
      %v346 = vadd.f32 %v339, %v345
      %v347 = vmul.f32 %v344, %v344
      %v348 = vadd.f32 %v341, %v347
      %v349 = vld [vmem:[%s276 + $0x20] sm:$0xff]
      %v350 = vld [vmem:[%s292 + $0x20] sm:$0xff]
      %v351 = vadd.f32 %v349, %v350
      %v352 = vmul.f32 %v349, %v350
      %v353 = vadd.f32 %v346, %v352
      %v354 = vmul.f32 %v351, %v351
      %v355 = vadd.f32 %v348, %v354
      %v356 = vld [vmem:[%s276 + $0x28] sm:$0xff]
      %v357 = vld [vmem:[%s292 + $0x28] sm:$0xff]
      %v358 = vadd.f32 %v356, %v357
      %v359 = vmul.f32 %v356, %v357
      %v360 = vadd.f32 %v353, %v359
      %v361 = vmul.f32 %v358, %v358
      %v362 = vadd.f32 %v355, %v361
      %v363 = vld [vmem:[%s276 + $0x30] sm:$0xff]
      %v364 = vld [vmem:[%s292 + $0x30] sm:$0xff]
      %v365 = vadd.f32 %v363, %v364
      %v366 = vmul.f32 %v363, %v364
      %v367 = vadd.f32 %v360, %v366
      %v368 = vmul.f32 %v365, %v365
      %v369 = vadd.f32 %v362, %v368
      %v370 = vld [vmem:[%s276 + $0x38] sm:$0xff]
      %v371 = vld [vmem:[%s292 + $0x38] sm:$0xff]
      %v372 = vadd.f32 %v370, %v371
      %v373 = vmul.f32 %v370, %v371
      %v374 = vadd.f32 %v367, %v373
      %v375 = vmul.f32 %v372, %v372
      %v376 = vadd.f32 %v369, %v375
      %377 = vst [vmem:[%s304] sm:$0xff] %v374
      %378 = vst [vmem:[%s312] sm:$0xff] %v376
      %p379 = scmp.lt.s32.totalorder %s20, 0
      %s380 = scalar_select %p379, %s20, 0
      %p381 = scmp.lt.s32.totalorder %s21, 1
      %s382 = scalar_select %p381, %s21, 1
      %s383 = smul.addr %s380, 2
      %s384 = sadd.s32 %s382, %s383
      %s385 = smul.addr %s384, 8
      %s386 = scalar_lea.vmem %s2, %s385
      %p387 = scmp.lt.s32.totalorder %s20, 0
      %s388 = scalar_select %p387, %s20, 0
      %p389 = scmp.lt.s32.totalorder %s21, 1
      %s390 = scalar_select %p389, %s21, 1
      %s391 = smul.addr %s388, 2
      %s392 = sadd.s32 %s390, %s391
      %s393 = smul.addr %s392, 8
      %s394 = scalar_lea.vmem %s3, %s393
      // Predicated region
      $region33: #{dice_loss.1} parent=27 // pred_check
        %p395 = pneg %p122
      $region34: #{dice_loss.1} parent=27 // pred_check_branch
        %397 = sbr.rel (%p395) target = $region36
      $region35: #{dice_loss.1} parent=27 // pred_region
        _
      $region36: #{dice_loss.1} parent=27 // pred_fallthru
        _
      // Predicated region
      $region37: #{dice_loss.1} parent=27 // pred_check
        %p398 = pneg %p150
      $region38: #{dice_loss.1} parent=27 // pred_check_branch
        %400 = sbr.rel (%p398) target = $region40
      $region39: #{dice_loss.1} parent=27 // pred_region
        _
      $region40: #{dice_loss.1} parent=27 // pred_fallthru
        _
    $region28: #{dice_loss.1} parent=5 // pred_fallthru
      _
    %p401 = scmp.le.s32.totalorder 2, %s10
    // Predicated region
    $region41: #{dice_loss.1} parent=5 // pred_check
      %p402 = pneg %p401
    $region42: #{dice_loss.1} parent=5 // pred_check_branch
      %404 = sbr.rel (%p402) target = $region44
    $region43: #{dice_loss.1} parent=5 // pred_region
      %s405 = ssub.s32 %s10, 2
      // Predicated region
      $region45: #{dice_loss.1} parent=43 // pred_check
        %p406 = pneg %p128
      $region46: #{dice_loss.1} parent=43 // pred_check_branch
        %408 = sbr.rel (%p406) target = $region48
      $region47: #{dice_loss.1} parent=43 // pred_region
        %p409 = scmp.lt.s32.totalorder %s23, 0
        %s410 = scalar_select %p409, %s23, 0
        %p411 = scmp.lt.s32.totalorder %s24, 1
        %s412 = scalar_select %p411, %s24, 1
        %s413 = smul.addr %s410, 2
        %s414 = sadd.s32 %s412, %s413
        %s415 = smul.addr %s414, 8
        %s416 = scalar_lea.vmem %s2, %s415
      $region48: #{dice_loss.1} parent=43 // pred_fallthru
        _
      // Predicated region
      $region49: #{dice_loss.1} parent=43 // pred_check
        %p417 = pneg %p156
      $region50: #{dice_loss.1} parent=43 // pred_check_branch
        %419 = sbr.rel (%p417) target = $region52
      $region51: #{dice_loss.1} parent=43 // pred_region
        %p420 = scmp.lt.s32.totalorder %s23, 0
        %s421 = scalar_select %p420, %s23, 0
        %p422 = scmp.lt.s32.totalorder %s24, 1
        %s423 = scalar_select %p422, %s24, 1
        %s424 = smul.addr %s421, 2
        %s425 = sadd.s32 %s423, %s424
        %s426 = smul.addr %s425, 8
        %s427 = scalar_lea.vmem %s3, %s426
      $region52: #{dice_loss.1} parent=43 // pred_fallthru
        _
    $region44: #{dice_loss.1} parent=5 // pred_fallthru
      _
  $region6: #{dice_loss.1} parent=0 // loop_footer
    %s14 = sadd.s32 1, %s10
  $region7: #{dice_loss.1} parent=0 // loop_footer_branch
    %9 = sbr.rel target = $region3
  $region8: #{dice_loss.1} parent=0 // loop_exit
    _

</llo_original>
